<compile_context>
chip_gen: v7x
topology: tpu7x:2x2x1
jax: 0.10.0
libtpu: 0.0.40
codegen_flags: <defaults>
</compile_context>

<pallas_src>
import functools

import jax
import jax.numpy as jnp
from jax import lax
from jax.experimental import pallas as pl
from jax.experimental.pallas import tpu as pltpu

_MIB = 1024 * 1024
_LANE = 128


# ----------------------------------------------------------------------------
# Pallas kernel: row-tiled matmul + bias.
#   x: (tm, K) bf16   w: (K, Np) bf16 (resident)   b: (1, Np) f32  ->  o: (tm, Np)
# ----------------------------------------------------------------------------
def _matmul_bias_kernel(x_ref, w_ref, b_ref, o_ref):
    acc = jnp.dot(x_ref[...], w_ref[...], preferred_element_type=jnp.float32)
    o_ref[...] = (acc + b_ref[...]).astype(o_ref.dtype)


def _vmem_capacity_bytes():
    """Physical VMEM of this chip; conservative 64 MiB (v7x) fallback."""
    try:
        return int(pltpu.get_tpu_info().vmem_capacity_bytes), True
    except Exception:  # old jax / interpret mode / non-TPU tracing
        return 64 * _MIB, False


def _working_set_bytes(tm, K, Np, out_itemsize):
    # BlockSpec double-buffers every operand (the weight/bias revisit the same
    # block but still get two buffers allocated).
    return (2 * tm * K * 2                      # x tiles, bf16
            + 2 * K * Np * 2                    # resident weight, bf16
            + 2 * tm * Np * out_itemsize        # output tiles
            + 2 * Np * 4)                       # bias, f32


def _select_row_tile(M, K, Np, out_itemsize, *, budget, even_steps):
    """Pick a large aligned row tile; M gets padded up to steps * tm."""
    candidates = (1024, 512, 256, 128, 64, 32, 16)   # all 16-aligned (bf16
    tm = None                                        # sublane packing)
    for cand in candidates:
        if _working_set_bytes(cand, K, Np, out_itemsize) > budget:
            continue
        steps = pl.cdiv(M, cand)
        pad = steps * cand - M
        if pad > (steps * cand) // 2:   # never more than 2x padded work
            continue
        tm = cand
        break
    if tm is None:
        # Nothing fits the budget: smallest tile, let vmem_limit_bytes absorb
        # it (see K/N-tiling TODO in the header for the real fix).
        tm = candidates[-1]
    steps = pl.cdiv(M, tm)
    if even_steps and steps >= 3 and steps % 2 == 1:
        # v7x megacore: the "parallel" axis is sharded across 2 TensorCores;
        # an odd step count idles one TC for a whole tile.  One extra padded
        # tile on a mem-bound kernel is cheaper.
        steps += 1
    return tm, steps


def matmul_bias(x_bf16, w_bf16, b_f32, *, out_dtype=jnp.float32):
    """(M,K)bf16 @ (K,Np)bf16 + (1,Np)f32 -> (M,Np) via a Pallas MXU kernel.

    Np must be a multiple of 128 (lane-dense output stores).  out_dtype may be
    set to jnp.bfloat16 by consumers that tolerate it (halves HBM writeback).
    """
    M, K = x_bf16.shape
    Kw, Np = w_bf16.shape
    assert K == Kw and Np % _LANE == 0
    out_itemsize = jnp.dtype(out_dtype).itemsize

    vmem_cap, detected = _vmem_capacity_bytes()
    budget = int(vmem_cap * 0.4)                      # ~25 MiB v7x, ~51 MiB v5e/v6e
    is_v7x_like = detected and vmem_cap <= 96 * _MIB  # 2 TCs, 64 MiB VMEM

    tm, steps = _select_row_tile(M, K, Np, out_itemsize,
                                 budget=budget, even_steps=is_v7x_like)
    Mp = steps * tm
    if Mp != M:
        x_bf16 = jnp.pad(x_bf16, ((0, Mp - M), (0, 0)))

    working = _working_set_bytes(tm, K, Np, out_itemsize)
    vmem_limit = int(min(vmem_cap * 0.9, max(32 * _MIB, working + 8 * _MIB)))

    cost = pl.CostEstimate(
        flops=2 * Mp * K * Np,
        transcendentals=0,
        bytes_accessed=(Mp * K * 2 + K * Np * 2 + Np * 4
                        + Mp * Np * out_itemsize),
    )

    out = pl.pallas_call(
        _matmul_bias_kernel,
        out_shape=jax.ShapeDtypeStruct((Mp, Np), out_dtype),
        grid_spec=pltpu.PrefetchScalarGridSpec(
            num_scalar_prefetch=0,
            grid=(steps,),
            in_specs=[
                pl.BlockSpec((tm, K), lambda i: (i, 0)),
                pl.BlockSpec((K, Np), lambda i: (0, 0)),   # resident weight
                pl.BlockSpec((1, Np), lambda i: (0, 0)),   # resident bias
            ],
            out_specs=pl.BlockSpec((tm, Np), lambda i: (i, 0)),
        ),
        compiler_params=pltpu.CompilerParams(
            dimension_semantics=("parallel",),
            vmem_limit_bytes=vmem_limit,
        ),
        cost_estimate=cost,
    )(x_bf16, w_bf16, b_f32)
    return out[:M] if Mp != M else out


# ----------------------------------------------------------------------------
# Stand-in encoder: 3x3 conv, stride 2, pad 1, ReLU.
# Emits (W', H', N, F) in bf16 so the downstream 1x1-conv input cast and the
# module's transpose/flatten/permute are all free (fused / pure reshapes).
# ----------------------------------------------------------------------------
def encoder_forward(x_nchw, w_enc, b_enc):
    # TODO(synk): real encoder is an arbitrary pretrained timm backbone; this
    # deterministic conv+ReLU stand-in only fixes shapes/dtypes for the rest.
    x_whc = jnp.transpose(x_nchw, (0, 3, 2, 1))       # (N, W, H, C)  (tiny)
    w_t = jnp.transpose(w_enc, (3, 2, 1, 0))          # (kw, kh, C, F)
    feat = lax.conv_general_dilated(
        x_whc, w_t, window_strides=(2, 2), padding=((1, 1), (1, 1)),
        dimension_numbers=("NHWC", "HWIO", "HWNC"),
        precision=lax.Precision.HIGHEST)              # (W', H', N, F)
    feat = jnp.maximum(feat + b_enc, 0.0)
    return feat.astype(jnp.bfloat16)                  # cast fused into epilogue


# ----------------------------------------------------------------------------
# One-time parameter preparation (done at load time, not per forward call):
# pre-transposed (F, hidden) 1x1-conv weight, lane-padded to 128, bf16.
# ----------------------------------------------------------------------------
def prepare_timm_params(params):
    hidden, in_features = params["w_1x1"].shape[:2]
    n_pad = ((hidden + _LANE - 1) // _LANE) * _LANE
    w_mat = params["w_1x1"].reshape(hidden, in_features).T        # (F, hidden)
    w_mat = jnp.pad(w_mat, ((0, 0), (0, n_pad - hidden))).astype(jnp.bfloat16)
    b_pad = jnp.pad(params["b_1x1"], (0, n_pad - hidden)).astype(jnp.float32)
    return {
        "w_enc": params["w_enc"],
        "b_enc": params["b_enc"],
        "w_mat": w_mat,                   # (F, n_pad) bf16
        "b_pad": b_pad.reshape(1, n_pad),  # (1, n_pad) f32
    }


# ----------------------------------------------------------------------------
# Full Timm.forward
# ----------------------------------------------------------------------------
def timm_forward(x_nchw, prepared, *, hidden):
    feat = encoder_forward(x_nchw, prepared["w_enc"], prepared["b_enc"])
    # self.dropout: identity at inference time.
    Wo, Ho, Nb, F = feat.shape

    # last_conv_1x1 + transpose(-1,-2) + flatten(2) + permute(-1,0,1):
    #   out[w*Ho + h, n, c] = feat[w, h, n, :] @ w1[c, :] + b1[c]
    # feat is already (W', H', N, F) bf16, so this reshape is free.
    rows = feat.reshape(Wo * Ho * Nb, F)                          # (M, F) bf16
    y = matmul_bias(rows, prepared["w_mat"], prepared["b_pad"])   # (M, n_pad)
    y = y[:, :hidden]                                             # drop lane pad
    return y.reshape(Wo * Ho, Nb, hidden)                         # (W'*H', N, hid)


# ----------------------------------------------------------------------------
# Pure-JAX reference mirroring the PyTorch op sequence (NCHW, f32).
# ----------------------------------------------------------------------------
def reference_forward(x_nchw, params):
    conv = lax.conv_general_dilated(
        x_nchw, params["w_enc"], window_strides=(2, 2),
        padding=((1, 1), (1, 1)),
        dimension_numbers=("NCHW", "OIHW", "NCHW"),
        precision=lax.Precision.HIGHEST)
    conv = jnp.maximum(conv + params["b_enc"][None, :, None, None], 0.0)
    Nb, F, Ho, Wo = conv.shape
    hidden = params["w_1x1"].shape[0]
    y = jnp.einsum("nfhw,cf->nchw", conv, params["w_1x1"].reshape(hidden, F),
                   precision=lax.Precision.HIGHEST)
    y = y + params["b_1x1"][None, :, None, None]
    y = jnp.swapaxes(y, -1, -2)                  # (N, hid, W', H')
    y = y.reshape(Nb, hidden, Wo * Ho)           # flatten(2)
    return jnp.transpose(y, (2, 0, 1))           # (W'*H', N, hid)


def init_params(key, in_ch, in_features, hidden):
    k1, k2, k3, k4 = jax.random.split(key, 4)
    return {
        "w_enc": jax.random.normal(k1, (in_features, in_ch, 3, 3),
                                   jnp.float32) * 0.1,
        "b_enc": jax.random.normal(k2, (in_features,), jnp.float32) * 0.01,
        "w_1x1": jax.random.normal(k3, (hidden, in_features, 1, 1),
                                   jnp.float32) * 0.1,
        "b_1x1": jax.random.normal(k4, (hidden,), jnp.float32) * 0.01,
    }


if __name__ == "__main__":
    key = jax.random.PRNGKey(0)
    kx, kp = jax.random.split(key)

    # Small shapes: batch=2, channels=4, spatial=16x16.
    N, C, H, W = 2, 4, 16, 16
    in_features = 32   # stand-in for base_model.num_features
    hidden = 32        # stand-in for hidden=256

    x = jax.random.normal(kx, (N, C, H, W), jnp.float32)
    params = init_params(kp, C, in_features, hidden)
    prepared = prepare_timm_params(params)   # one-time weight prep

    fwd = jax.jit(functools.partial(timm_forward, hidden=hidden))
    out = jax.block_until_ready(fwd(x, prepared))

    # Expected output shape: (W'*H', N, hidden) = (64, 2, 32)
    assert out.shape == ((W // 2) * (H // 2), N, hidden), out.shape
    assert bool(jnp.all(jnp.isfinite(out)))

    # Numerical check vs the f32 reference (bf16 MXU operands => ~1e-2 tol).
    ref = reference_forward(x, params)
    max_err = float(jnp.max(jnp.abs(out - ref)))
    assert max_err < 5e-2, f"max abs err {max_err}"

    print("KERNEL_OK")
</pallas_src>

<mosaic_0001>
module attributes {stable_mosaic.version = 11 : i64} {
  func.func @_matmul_bias_kernel(%arg0: i32, %arg1: memref<256x32xbf16, #tpu.memory_space<vmem>>, %arg2: memref<32x128xbf16, #tpu.memory_space<vmem>>, %arg3: memref<1x128xf32, #tpu.memory_space<vmem>>, %arg4: memref<256x128xf32, #tpu.memory_space<vmem>>) attributes {dimension_semantics = [#tpu.dimension_semantics<parallel>], iteration_bounds = array<i64: 1>, scalar_prefetch = 0 : i64, scratch_operands = 0 : i64, tpu.core_type = #tpu.core_type<tc>, window_params = [{transform_indices = @transform_0, window_bounds = array<i64: 256, 32>}, {pipeline_mode = #tpu.pipeline_mode<synchronous>, transform_indices = @transform_1, window_bounds = array<i64: 32, 128>}, {pipeline_mode = #tpu.pipeline_mode<synchronous>, transform_indices = @transform_2, window_bounds = array<i64: 1, 128>}, {transform_indices = @transform_3, window_bounds = array<i64: 256, 128>}]} {
    %c0 = arith.constant 0 : index
    %c0_0 = arith.constant 0 : index
    %0 = vector.load %arg1[%c0, %c0_0] : memref<256x32xbf16, #tpu.memory_space<vmem>>, vector<256x32xbf16>
    %c0_1 = arith.constant 0 : index
    %c0_2 = arith.constant 0 : index
    %1 = vector.load %arg2[%c0_1, %c0_2] : memref<32x128xbf16, #tpu.memory_space<vmem>>, vector<32x128xbf16>
    %cst = arith.constant dense<0.000000e+00> : vector<256x128xf32>
    %2 = tpu.matmul %0, %1, %cst {dimension_numbers = #tpu.dot_dimension_numbers<[1], [0], [0], [1], [0, 0, 1, 1], [], []>} : vector<256x32xbf16>, vector<32x128xbf16>, vector<256x128xf32> -> vector<256x128xf32>
    %c0_3 = arith.constant 0 : index
    %c0_4 = arith.constant 0 : index
    %3 = vector.load %arg3[%c0_3, %c0_4] : memref<1x128xf32, #tpu.memory_space<vmem>>, vector<1x128xf32>
    %4 = vector.broadcast %3 : vector<1x128xf32> to vector<256x128xf32>
    %5 = arith.addf %2, %4 : vector<256x128xf32>
    %c0_5 = arith.constant 0 : index
    %c0_6 = arith.constant 0 : index
    %6 = vector.load %arg4[%c0_5, %c0_6] : memref<256x128xf32, #tpu.memory_space<vmem>>, vector<256x128xf32>
    tpu.vector_store %arg4[%c0_5, %c0_6], %5 {strides = array<i32>} : memref<256x128xf32, #tpu.memory_space<vmem>>, vector<256x128xf32>,
    return
  }
  func.func @transform_0(%arg0: i32) -> (i32, i32) {
    %c0_i32 = arith.constant 0 : i32
    %c0_i32_0 = arith.constant 0 : i32
    return %arg0, %c0_i32 : i32, i32
  }
  func.func @transform_1(%arg0: i32) -> (i32, i32) {
    %c0_i32 = arith.constant 0 : i32
    %c0_i32_0 = arith.constant 0 : i32
    %c0_i32_1 = arith.constant 0 : i32
    return %c0_i32, %c0_i32_0 : i32, i32
  }
  func.func @transform_2(%arg0: i32) -> (i32, i32) {
    %c0_i32 = arith.constant 0 : i32
    %c0_i32_0 = arith.constant 0 : i32
    %c0_i32_1 = arith.constant 0 : i32
    return %c0_i32, %c0_i32_0 : i32, i32
  }
  func.func @transform_3(%arg0: i32) -> (i32, i32) {
    %c0_i32 = arith.constant 0 : i32
    %c0_i32_0 = arith.constant 0 : i32
    return %arg0, %c0_i32 : i32, i32
  }
}

</mosaic_0001>

<llo_original>
// kernel: timm_forward.1
$region0: #{timm_forward.1}
  #allocation0 [shape = 'u32[]', space=smem, size = 0x4, offset = 0x4, fixed_abs, tag = 'smem constant byte address 0x4 - core index']
  #allocation1 [shape = 'u32[144,128]{1,0:T(1,128)}', space=vmem, size = 0x12000, scoped, tag = 'internal scratch']
  %s0 = inlined_call_operand.vmem [shape: bf16[256,32], index: 0, kind: input, shape index: {}]
  %s1 = inlined_call_operand.vmem [shape: bf16[32,128], index: 1, kind: input, shape index: {}]
  %s2 = inlined_call_operand.vmem [shape: f32[1,128], index: 2, kind: input, shape index: {}]
  %s3 = inlined_call_operand.vmem [shape: f32[256,128], index: 3, kind: output, shape index: {}]
  %s4 = sld [smem:[#allocation0]]
  $region22: #{timm_forward.1} parent=0
    _
  %s6 = ssub.s32 1, %s4
  %s7 = scalar_select 0, %s6, %s4
  // Predicated region
  $region2: #{timm_forward.1} parent=0 // pred_check
    _
  $region3: #{timm_forward.1} parent=0 // pred_check_branch
    %9 = sbr.rel (0) target = $region5
  $region4: #{timm_forward.1} parent=0 // pred_region
    _
  $region5: #{timm_forward.1} parent=0 // pred_fallthru
    _
  // Predicated region
  $region6: #{timm_forward.1} parent=0 // pred_check
    _
  $region7: #{timm_forward.1} parent=0 // pred_check_branch
    %11 = sbr.rel (0) target = $region9
  $region8: #{timm_forward.1} parent=0 // pred_region
    _
  $region9: #{timm_forward.1} parent=0 // pred_fallthru
    _
  // Predicated region
  $region10: #{timm_forward.1} parent=0 // pred_check
    _
  $region11: #{timm_forward.1} parent=0 // pred_check_branch
    %13 = sbr.rel (0) target = $region13
  $region12: #{timm_forward.1} parent=0 // pred_region
    _
  $region13: #{timm_forward.1} parent=0 // pred_fallthru
    _
  %v15 = vld [vmem:[%s0] sm:$0xf]
  %v16 = vld [vmem:[%s0 + $0x4] sm:$0xf]
  %v17 = vld [vmem:[%s0 + $0x8] sm:$0xf]
  %v18 = vld [vmem:[%s0 + $0xc] sm:$0xf]
  %v19 = vld [vmem:[%s0 + $0x10] sm:$0xf]
  %v20 = vld [vmem:[%s0 + $0x14] sm:$0xf]
  %v21 = vld [vmem:[%s0 + $0x18] sm:$0xf]
  %v22 = vld [vmem:[%s0 + $0x1c] sm:$0xf]
  %v23 = vld [vmem:[%s0 + $0x20] sm:$0xf]
  %v24 = vld [vmem:[%s0 + $0x24] sm:$0xf]
  %v25 = vld [vmem:[%s0 + $0x28] sm:$0xf]
  %v26 = vld [vmem:[%s0 + $0x2c] sm:$0xf]
  %v27 = vld [vmem:[%s0 + $0x30] sm:$0xf]
  %v28 = vld [vmem:[%s0 + $0x34] sm:$0xf]
  %v29 = vld [vmem:[%s0 + $0x38] sm:$0xf]
  %v30 = vld [vmem:[%s0 + $0x3c] sm:$0xf]
  %v31 = vld [vmem:[%s0 + $0x40] sm:$0xf]
  %v32 = vld [vmem:[%s0 + $0x44] sm:$0xf]
  %v33 = vld [vmem:[%s0 + $0x48] sm:$0xf]
  %v34 = vld [vmem:[%s0 + $0x4c] sm:$0xf]
  %v35 = vld [vmem:[%s0 + $0x50] sm:$0xf]
  %v36 = vld [vmem:[%s0 + $0x54] sm:$0xf]
  %v37 = vld [vmem:[%s0 + $0x58] sm:$0xf]
  %v38 = vld [vmem:[%s0 + $0x5c] sm:$0xf]
  %v39 = vld [vmem:[%s0 + $0x60] sm:$0xf]
  %v40 = vld [vmem:[%s0 + $0x64] sm:$0xf]
  %v41 = vld [vmem:[%s0 + $0x68] sm:$0xf]
  %v42 = vld [vmem:[%s0 + $0x6c] sm:$0xf]
  %v43 = vld [vmem:[%s0 + $0x70] sm:$0xf]
  %v44 = vld [vmem:[%s0 + $0x74] sm:$0xf]
  %v45 = vld [vmem:[%s0 + $0x78] sm:$0xf]
  %v46 = vld [vmem:[%s0 + $0x7c] sm:$0xf]
  %v47 = vld [vmem:[%s1] sm:$0xf]
  %v48 = vld [vmem:[%s1 + $0x4] sm:$0xf]
  %v49 = vld [vmem:[%s1 + $0x8] sm:$0xf]
  %v50 = vld [vmem:[%s1 + $0xc] sm:$0xf]
  %v51 = vld [vmem:[%s2] sm:$0x1]
  %v53 = vlaneseq
  %v54 = vshrl.u32 %v53, 7
  %v55 = vsub.s32 0, %v54
  %v56 = vrot.slane %v51, %v55
  %v90 = vunpack.c.l.b16 %v15
  %v91 = vunpack.c.l.b16 %v16
  %v92 = vunpack.c.l.b16 %v17
  %v93 = vunpack.c.l.b16 %v18
  %v94 = vunpack.c.l.b16 %v19
  %v95 = vunpack.c.l.b16 %v20
  %v96 = vunpack.c.l.b16 %v21
  %v97 = vunpack.c.l.b16 %v22
  %v98 = vunpack.c.l.b16 %v23
  %v99 = vunpack.c.l.b16 %v24
  %v100 = vunpack.c.l.b16 %v25
  %v101 = vunpack.c.l.b16 %v26
  %v102 = vunpack.c.l.b16 %v27
  %v103 = vunpack.c.l.b16 %v28
  %v104 = vunpack.c.l.b16 %v29
  %v105 = vunpack.c.l.b16 %v30
  %v106 = vunpack.c.l.b16 %v31
  %v107 = vunpack.c.l.b16 %v32
  %v108 = vunpack.c.l.b16 %v33
  %v109 = vunpack.c.l.b16 %v34
  %v110 = vunpack.c.l.b16 %v35
  %v111 = vunpack.c.l.b16 %v36
  %v112 = vunpack.c.l.b16 %v37
  %v113 = vunpack.c.l.b16 %v38
  %v114 = vunpack.c.l.b16 %v39
  %v115 = vunpack.c.l.b16 %v40
  %v116 = vunpack.c.l.b16 %v41
  %v117 = vunpack.c.l.b16 %v42
  %v118 = vunpack.c.l.b16 %v43
  %v119 = vunpack.c.l.b16 %v44
  %v120 = vunpack.c.l.b16 %v45
  %v121 = vunpack.c.l.b16 %v46
  %v122 = vpack.c.b16 %v91, %v90
  %v123 = vpack.c.b16 %v93, %v92
  %v124 = vpack.c.b16 %v95, %v94
  %v125 = vpack.c.b16 %v97, %v96
  %v126 = vpack.c.b16 %v99, %v98
  %v127 = vpack.c.b16 %v101, %v100
  %v128 = vpack.c.b16 %v103, %v102
  %v129 = vpack.c.b16 %v105, %v104
  %v130 = vpack.c.b16 %v107, %v106
  %v131 = vpack.c.b16 %v109, %v108
  %v132 = vpack.c.b16 %v111, %v110
  %v133 = vpack.c.b16 %v113, %v112
  %v134 = vpack.c.b16 %v115, %v114
  %v135 = vpack.c.b16 %v117, %v116
  %v136 = vpack.c.b16 %v119, %v118
  %v137 = vpack.c.b16 %v121, %v120
  %v142 = vunpack.c.l.b16 %v47
  %v143 = vunpack.c.l.b16 %v48
  %v144 = vunpack.c.l.b16 %v49
  %v145 = vunpack.c.l.b16 %v50
  %v146 = vpack.c.b16 %v143, %v142
  %v147 = vpack.c.b16 %v145, %v144
  %vm150 = vcmask 261120
  %v152 = vsel %vm150, %v122, 0
  %v155 = vsel %vm150, %v123, 0
  %v158 = vsel %vm150, %v124, 0
  %v161 = vsel %vm150, %v125, 0
  %v164 = vsel %vm150, %v126, 0
  %v167 = vsel %vm150, %v127, 0
  %v170 = vsel %vm150, %v128, 0
  %v173 = vsel %vm150, %v129, 0
  %v176 = vsel %vm150, %v130, 0
  %v179 = vsel %vm150, %v131, 0
  %v182 = vsel %vm150, %v132, 0
  %v185 = vsel %vm150, %v133, 0
  %v188 = vsel %vm150, %v134, 0
  %v191 = vsel %vm150, %v135, 0
  %v194 = vsel %vm150, %v136, 0
  %v197 = vsel %vm150, %v137, 0
  %199 = vmatprep.subr.bf16.mxu0 0
  %200 = vmatpush1.bf16.msra.mxu0 %v146
  %201 = vmatprep.subr.bf16.mxu0 0
  %202 = vmatpush1.bf16.msra.mxu0 %v147
  %203 = vmatprep.subr.bf16.mxu0 0
  %204 = vmatpush1.bf16.msra.mxu0 0
  %205 = vmatprep.subr.bf16.mxu0 0
  %206 = vmatpush1.bf16.msra.mxu0 0
  %207 = vmatprep.subr.bf16.mxu0 0
  %208 = vmatpush1.bf16.msra.mxu0 0
  %209 = vmatprep.subr.bf16.mxu0 0
  %210 = vmatpush1.bf16.msra.mxu0 0
  %211 = vmatprep.subr.bf16.mxu0 0
  %212 = vmatpush1.bf16.msra.mxu0 0
  %213 = vmatprep.subr.bf16.mxu0 0
  %214 = vmatpush1.bf16.msra.mxu0 0
  %215 = vmatprep.subr.bf16.mxu0 0
  %216 = vmatpush1.bf16.msra.mxu0 0
  %217 = vmatprep.subr.bf16.mxu0 0
  %218 = vmatpush1.bf16.msra.mxu0 0
  %219 = vmatprep.subr.bf16.mxu0 0
  %220 = vmatpush1.bf16.msra.mxu0 0
  %221 = vmatprep.subr.bf16.mxu0 0
  %222 = vmatpush1.bf16.msra.mxu0 0
  %223 = vmatprep.subr.bf16.mxu0 0
  %224 = vmatpush1.bf16.msra.mxu0 0
  %225 = vmatprep.subr.bf16.mxu0 0
  %226 = vmatpush1.bf16.msra.mxu0 0
  %227 = vmatprep.subr.bf16.mxu0 0
  %228 = vmatpush1.bf16.msra.mxu0 0
  %229 = vmatprep.subr.bf16.mxu0 0
  %230 = vmatpush1.bf16.msra.mxu0 0
  %231 = vmatprep.mubr.bf16.mxu0 0
  %232 = vmatmul.mubr.bf16.gmra.mrb[0].mxu0 %v152
  %v233 = vpop.f32.mrb[0].mxu0
  %v234 = vadd.f32 %v56, %v233
  %v235 = vpop.f32.mrb[0].mxu0
  %v236 = vpop.f32.mrb[0].mxu0
  %v237 = vadd.f32 %v56, %v236
  %v238 = vpop.f32.mrb[0].mxu0
  %239 = vmatprep.mubr.bf16.mxu0 0
  %240 = vmatmul.mubr.bf16.gmra.mrb[0].mxu0 %v155
  %v241 = vpop.f32.mrb[0].mxu0
  %v242 = vadd.f32 %v56, %v241
  %v243 = vpop.f32.mrb[0].mxu0
  %v244 = vpop.f32.mrb[0].mxu0
  %v245 = vadd.f32 %v56, %v244
  %v246 = vpop.f32.mrb[0].mxu0
  %247 = vmatprep.mubr.bf16.mxu0 0
  %248 = vmatmul.mubr.bf16.gmra.mrb[0].mxu0 %v158
  %v249 = vpop.f32.mrb[0].mxu0
  %v250 = vadd.f32 %v56, %v249
  %v251 = vpop.f32.mrb[0].mxu0
  %v252 = vpop.f32.mrb[0].mxu0
  %v253 = vadd.f32 %v56, %v252
  %v254 = vpop.f32.mrb[0].mxu0
  %255 = vmatprep.mubr.bf16.mxu0 0
  %256 = vmatmul.mubr.bf16.gmra.mrb[0].mxu0 %v161
  %v257 = vpop.f32.mrb[0].mxu0
  %v258 = vadd.f32 %v56, %v257
  %v259 = vpop.f32.mrb[0].mxu0
  %v260 = vpop.f32.mrb[0].mxu0
  %v261 = vadd.f32 %v56, %v260
  %v262 = vpop.f32.mrb[0].mxu0
  %263 = vmatprep.mubr.bf16.mxu0 0
  %264 = vmatmul.mubr.bf16.gmra.mrb[0].mxu0 %v164
  %v265 = vpop.f32.mrb[0].mxu0
  %v266 = vadd.f32 %v56, %v265
  %v267 = vpop.f32.mrb[0].mxu0
  %v268 = vpop.f32.mrb[0].mxu0
  %v269 = vadd.f32 %v56, %v268
  %v270 = vpop.f32.mrb[0].mxu0
  %271 = vmatprep.mubr.bf16.mxu0 0
  %272 = vmatmul.mubr.bf16.gmra.mrb[0].mxu0 %v167
  %v273 = vpop.f32.mrb[0].mxu0
  %v274 = vadd.f32 %v56, %v273
  %v275 = vpop.f32.mrb[0].mxu0
  %v276 = vpop.f32.mrb[0].mxu0
  %v277 = vadd.f32 %v56, %v276
  %v278 = vpop.f32.mrb[0].mxu0
  %279 = vmatprep.mubr.bf16.mxu0 0
  %280 = vmatmul.mubr.bf16.gmra.mrb[0].mxu0 %v170
  %v281 = vpop.f32.mrb[0].mxu0
  %v282 = vadd.f32 %v56, %v281
  %v283 = vpop.f32.mrb[0].mxu0
  %v284 = vpop.f32.mrb[0].mxu0
  %v285 = vadd.f32 %v56, %v284
  %v286 = vpop.f32.mrb[0].mxu0
  %287 = vmatprep.mubr.bf16.mxu0 0
  %288 = vmatmul.mubr.bf16.gmra.mrb[0].mxu0 %v173
  %v289 = vpop.f32.mrb[0].mxu0
  %v290 = vadd.f32 %v56, %v289
  %v291 = vpop.f32.mrb[0].mxu0
  %v292 = vpop.f32.mrb[0].mxu0
  %v293 = vadd.f32 %v56, %v292
  %v294 = vpop.f32.mrb[0].mxu0
  %295 = vmatprep.mubr.bf16.mxu0 0
  %296 = vmatmul.mubr.bf16.gmra.mrb[0].mxu0 %v176
  %v297 = vpop.f32.mrb[0].mxu0
  %v298 = vadd.f32 %v56, %v297
  %v299 = vpop.f32.mrb[0].mxu0
  %v300 = vpop.f32.mrb[0].mxu0
  %v301 = vadd.f32 %v56, %v300
  %v302 = vpop.f32.mrb[0].mxu0
  %303 = vmatprep.mubr.bf16.mxu0 0
  %304 = vmatmul.mubr.bf16.gmra.mrb[0].mxu0 %v179
  %v305 = vpop.f32.mrb[0].mxu0
  %v306 = vadd.f32 %v56, %v305
  %v307 = vpop.f32.mrb[0].mxu0
  %v308 = vpop.f32.mrb[0].mxu0
  %v309 = vadd.f32 %v56, %v308
  %v310 = vpop.f32.mrb[0].mxu0
  %311 = vmatprep.mubr.bf16.mxu0 0
  %312 = vmatmul.mubr.bf16.gmra.mrb[0].mxu0 %v182
  %v313 = vpop.f32.mrb[0].mxu0
  %v314 = vadd.f32 %v56, %v313
  %v315 = vpop.f32.mrb[0].mxu0
  %v316 = vpop.f32.mrb[0].mxu0
  %v317 = vadd.f32 %v56, %v316
  %v318 = vpop.f32.mrb[0].mxu0
  %319 = vmatprep.mubr.bf16.mxu0 0
  %320 = vmatmul.mubr.bf16.gmra.mrb[0].mxu0 %v185
  %v321 = vpop.f32.mrb[0].mxu0
  %v322 = vadd.f32 %v56, %v321
  %v323 = vpop.f32.mrb[0].mxu0
  %v324 = vpop.f32.mrb[0].mxu0
  %v325 = vadd.f32 %v56, %v324
  %v326 = vpop.f32.mrb[0].mxu0
  %327 = vmatprep.mubr.bf16.mxu0 0
  %328 = vmatmul.mubr.bf16.gmra.mrb[0].mxu0 %v188
  %v329 = vpop.f32.mrb[0].mxu0
  %v330 = vadd.f32 %v56, %v329
  %v331 = vpop.f32.mrb[0].mxu0
  %v332 = vpop.f32.mrb[0].mxu0
  %v333 = vadd.f32 %v56, %v332
  %v334 = vpop.f32.mrb[0].mxu0
  %335 = vmatprep.mubr.bf16.mxu0 0
  %336 = vmatmul.mubr.bf16.gmra.mrb[0].mxu0 %v191
  %v337 = vpop.f32.mrb[0].mxu0
  %v338 = vadd.f32 %v56, %v337
  %v339 = vpop.f32.mrb[0].mxu0
  %v340 = vpop.f32.mrb[0].mxu0
  %v341 = vadd.f32 %v56, %v340
  %v342 = vpop.f32.mrb[0].mxu0
  %343 = vmatprep.mubr.bf16.mxu0 0
  %344 = vmatmul.mubr.bf16.gmra.mrb[0].mxu0 %v194
  %v345 = vpop.f32.mrb[0].mxu0
  %v346 = vadd.f32 %v56, %v345
  %v347 = vpop.f32.mrb[0].mxu0
  %v348 = vpop.f32.mrb[0].mxu0
  %v349 = vadd.f32 %v56, %v348
  %v350 = vpop.f32.mrb[0].mxu0
  %351 = vmatprep.mubr.bf16.mxu0 0
  %352 = vmatmul.mubr.bf16.gmra.mrb[0].mxu0 %v197
  %v353 = vpop.f32.mrb[0].mxu0
  %v354 = vadd.f32 %v56, %v353
  %v355 = vpop.f32.mrb[0].mxu0
  %v356 = vpop.f32.mrb[0].mxu0
  %v357 = vadd.f32 %v56, %v356
  %v358 = vpop.f32.mrb[0].mxu0
  %359 = vdwg.mxu0
  %360 = vst [vmem:[%s3] sm:$0xff] %v234
  %361 = vst [vmem:[%s3 + $0x8] sm:$0xff] %v237
  %362 = vst [vmem:[%s3 + $0x10] sm:$0xff] %v242
  %363 = vst [vmem:[%s3 + $0x18] sm:$0xff] %v245
  %364 = vst [vmem:[%s3 + $0x20] sm:$0xff] %v250
  %365 = vst [vmem:[%s3 + $0x28] sm:$0xff] %v253
  %366 = vst [vmem:[%s3 + $0x30] sm:$0xff] %v258
  %367 = vst [vmem:[%s3 + $0x38] sm:$0xff] %v261
  %368 = vst [vmem:[%s3 + $0x40] sm:$0xff] %v266
  %369 = vst [vmem:[%s3 + $0x48] sm:$0xff] %v269
  %370 = vst [vmem:[%s3 + $0x50] sm:$0xff] %v274
  %371 = vst [vmem:[%s3 + $0x58] sm:$0xff] %v277
  %372 = vst [vmem:[%s3 + $0x60] sm:$0xff] %v282
  %373 = vst [vmem:[%s3 + $0x68] sm:$0xff] %v285
  %374 = vst [vmem:[%s3 + $0x70] sm:$0xff] %v290
  %375 = vst [vmem:[%s3 + $0x78] sm:$0xff] %v293
  %376 = vst [vmem:[%s3 + $0x80] sm:$0xff] %v298
  %377 = vst [vmem:[%s3 + $0x88] sm:$0xff] %v301
  %378 = vst [vmem:[%s3 + $0x90] sm:$0xff] %v306
  %379 = vst [vmem:[%s3 + $0x98] sm:$0xff] %v309
  %380 = vst [vmem:[%s3 + $0xa0] sm:$0xff] %v314
  %381 = vst [vmem:[%s3 + $0xa8] sm:$0xff] %v317
  %382 = vst [vmem:[%s3 + $0xb0] sm:$0xff] %v322
  %383 = vst [vmem:[%s3 + $0xb8] sm:$0xff] %v325
  %384 = vst [vmem:[%s3 + $0xc0] sm:$0xff] %v330
  %385 = vst [vmem:[%s3 + $0xc8] sm:$0xff] %v333
  %386 = vst [vmem:[%s3 + $0xd0] sm:$0xff] %v338
  %387 = vst [vmem:[%s3 + $0xd8] sm:$0xff] %v341
  %388 = vst [vmem:[%s3 + $0xe0] sm:$0xff] %v346
  %389 = vst [vmem:[%s3 + $0xe8] sm:$0xff] %v349
  %390 = vst [vmem:[%s3 + $0xf0] sm:$0xff] %v354
  %391 = vst [vmem:[%s3 + $0xf8] sm:$0xff] %v357
  // Predicated region
  $region14: #{timm_forward.1} parent=0 // pred_check
    _
  $region15: #{timm_forward.1} parent=0 // pred_check_branch
    %393 = sbr.rel (0) target = $region17
  $region16: #{timm_forward.1} parent=0 // pred_region
    _
  $region17: #{timm_forward.1} parent=0 // pred_fallthru
    _
  // Predicated region
  $region18: #{timm_forward.1} parent=0 // pred_check
    _
  $region19: #{timm_forward.1} parent=0 // pred_check_branch
    %395 = sbr.rel (0) target = $region21
  $region20: #{timm_forward.1} parent=0 // pred_region
    _
  $region21: #{timm_forward.1} parent=0 // pred_fallthru
    _

</llo_original>
